<compile_context>
chip_gen: v7x
topology: tpu7x:2x2x1
jax: 0.10.0
libtpu: 0.0.40
codegen_flags: <defaults>
</compile_context>

<pallas_src>
import math

import jax
import jax.numpy as jnp
from jax.experimental import pallas as pl
from jax.experimental.pallas import tpu as pltpu

NEG_INF = -1e30  # finite mask bias (avoids inf-inf NaN before max-subtraction)


# ----------------------------- in-kernel helpers -----------------------------

def _erf_approx(x):
    # Abramowitz & Stegun 7.1.26, |error| < 1.5e-7 -> effectively exact at float32.
    a1, a2, a3, a4, a5 = 0.254829592, -0.284496736, 1.421413741, -1.453152027, 1.061405429
    p = 0.3275911
    sgn = jnp.where(x >= 0.0, 1.0, -1.0)
    ax = jnp.abs(x)
    t = pl.reciprocal(1.0 + p * ax, approx=True)          # EUP slot instead of VALU divide
    poly = ((((a5 * t + a4) * t + a3) * t + a2) * t + a1) * t
    return sgn * (1.0 - poly * jnp.exp(-ax * ax))          # exp -> EUP


def _gelu_exact(x):
    # 0.5 * x * (1 + erf(x / sqrt(2)))  -- PyTorch nn.GELU() default
    return 0.5 * x * (1.0 + _erf_approx(x * (1.0 / math.sqrt(2.0))))


def _layernorm(x, g, b, eps):
    # PyTorch nn.LayerNorm: biased variance over last dim, statistics in float32.
    mu = jnp.mean(x, axis=-1, keepdims=True)
    var = jnp.mean(jnp.square(x - mu), axis=-1, keepdims=True)
    return (x - mu) * jax.lax.rsqrt(var + eps) * g + b


# ------------------------------ K/V projection kernel -------------------------

def make_kv_proj_kernel(hidden, num_heads):
    head = hidden // num_heads

    def kernel(x_ref, wkv_ref, bkv_ref, k_ref, v_ref):
        x = x_ref[0].astype(jnp.bfloat16)                                    # (TR, H)
        kv = jnp.dot(x, wkv_ref[...],
                     preferred_element_type=jnp.float32) + bkv_ref[0]        # (TR, 2H) f32
        # head-major outputs straight from lane slices (no XLA transpose between kernels)
        for h in range(num_heads):
            k_ref[0, h] = kv[:, h * head:(h + 1) * head].astype(jnp.bfloat16)
            v_ref[0, h] = kv[:, hidden + h * head:hidden + (h + 1) * head].astype(jnp.bfloat16)

    return kernel


# ------------------------------ decoder block core kernel ---------------------

def make_block_core_kernel(tq, tk, hidden, num_heads, eps):
    head = hidden // num_heads
    scale = 1.0 / math.sqrt(head)

    def kernel(x_ref, k_ref, v_ref,
               wq_ref, bq_ref, wo_ref, bo_ref, ln1g_ref, ln1b_ref,
               w1_ref, b1_ref, w2_ref, b2_ref, ln2g_ref, ln2b_ref,
               out_ref,
               q_scr, m_scr, l_scr, acc_scr, ctx_scr):
        qi = pl.program_id(1)
        kv = pl.program_id(2)
        nkv = pl.num_programs(2)

        # ---- kv == 0: project Q for this query tile, reset online-softmax state ----
        @pl.when(kv == 0)
        def _():
            x_bf = x_ref[0].astype(jnp.bfloat16)
            # fold the 1/sqrt(hd) scale into Q (f32, before the bf16 cast)
            qf = (jnp.dot(x_bf, wq_ref[...],
                          preferred_element_type=jnp.float32) + bq_ref[0]) * scale
            for h in range(num_heads):
                q_scr[h] = qf[:, h * head:(h + 1) * head].astype(jnp.bfloat16)
            m_scr[...] = jnp.full((num_heads, tq, 1), -jnp.inf, jnp.float32)
            l_scr[...] = jnp.zeros((num_heads, tq, 1), jnp.float32)
            acc_scr[...] = jnp.zeros((num_heads, tq, head), jnp.float32)

        # ---- online-softmax update; skip KV blocks that are fully causally masked ----
        @pl.when(kv * tk <= qi * tq + (tq - 1))
        def _():
            q = q_scr[...]                                               # (nh, TQ, hd) bf16
            k = k_ref[0]                                                 # (nh, TK, hd) bf16
            v = v_ref[0]                                                 # (nh, TK, hd) bf16
            s = jnp.einsum('hqd,hkd->hqk', q, k,
                           preferred_element_type=jnp.float32)           # (nh, TQ, TK)
            # causal mask for this (TQ, TK) tile only
            row = qi * tq + jax.lax.broadcasted_iota(jnp.int32, (tq, tk), 0)
            col = kv * tk + jax.lax.broadcasted_iota(jnp.int32, (tq, tk), 1)
            s = s + jnp.where(col <= row, 0.0, NEG_INF)[None, :, :]

            m_prev = m_scr[...]
            m_new = jnp.maximum(m_prev, jnp.max(s, axis=-1, keepdims=True))
            alpha = jnp.exp(m_prev - m_new)
            p = jnp.exp(s - m_new)
            l_scr[...] = alpha * l_scr[...] + jnp.sum(p, axis=-1, keepdims=True)
            acc_scr[...] = alpha * acc_scr[...] + jnp.einsum(
                'hqk,hkd->hqd', p.astype(jnp.bfloat16), v,
                preferred_element_type=jnp.float32)
            m_scr[...] = m_new

        # ---- kv == last: output projection + LN + residual, MLP + LN + residual ----
        @pl.when(kv == nkv - 1)
        def _():
            x = x_ref[0]                                                 # (TQ, H) f32 residual
            inv_l = pl.reciprocal(l_scr[...], approx=True)               # (nh, TQ, 1)
            ctx = acc_scr[...] * inv_l                                   # (nh, TQ, hd) f32
            # lane-concatenate heads once into a (TQ, H) bf16 scratch ...
            for h in range(num_heads):
                ctx_scr[:, h * head:(h + 1) * head] = ctx[h].astype(jnp.bfloat16)
            # ... so the output projection is one full-depth (TQ,H)@(H,H) MXU matmul
            y = jnp.dot(ctx_scr[...], wo_ref[...],
                        preferred_element_type=jnp.float32) + bo_ref[0]
            y = _layernorm(y, ln1g_ref[0], ln1b_ref[0], eps)
            x1 = x + y

            # BertMLP: Linear -> GELU -> Linear
            # TODO(synk): nn.Dropout treated as inference-mode identity (no in-kernel RNG mask).
            h1 = jnp.dot(x1.astype(jnp.bfloat16), w1_ref[...],
                         preferred_element_type=jnp.float32) + b1_ref[0]
            h1 = _gelu_exact(h1)
            h2 = jnp.dot(h1.astype(jnp.bfloat16), w2_ref[...],
                         preferred_element_type=jnp.float32) + b2_ref[0]
            z = _layernorm(h2, ln2g_ref[0], ln2b_ref[0], eps)
            out_ref[0] = x1 + z

    return kernel


# ------------------------------ wrapper ---------------------------------------

def _vmem_limit_bytes():
    """Generation-aware budget: ~5/8 of physical VMEM (40 MiB on v7x, 80 MiB on v5e/v6e)."""
    try:
        cap = int(pltpu.get_tpu_info().vmem_capacity_bytes)
    except Exception:  # conservative fallback if the query is unavailable
        cap = 64 * 1024 * 1024
    return max(32 * 1024 * 1024, min(cap * 5 // 8, 96 * 1024 * 1024))


def decoder_block_forward(x, p, *, num_heads, eps):
    B, S, H = x.shape
    assert H % num_heads == 0
    hd = H // num_heads

    # Query / KV tile sizes.  TODO(synk): no ragged-tail handling (S must divide the tile);
    # on v6e with large H and S >= 256, TQ=256 amortizes MXU weight pushes further.
    TQ = S if S < 128 else 128
    TK = S if S < 128 else 128
    assert S % TQ == 0 and S % TK == 0
    nq, nkv = S // TQ, S // TK

    vmem_limit = _vmem_limit_bytes()

    def rep2(a):
        z = (0,) * a.ndim
        return pl.BlockSpec(a.shape, lambda b, i, _z=z: _z)

    def rep3(a):
        z = (0,) * a.ndim
        return pl.BlockSpec(a.shape, lambda b, i, k, _z=z: _z)

    # ---- kernel 1: K/V projection, head-major outputs, tiled over (batch, seq rows) ----
    k_hm, v_hm = pl.pallas_call(
        make_kv_proj_kernel(H, num_heads),
        out_shape=tuple(jax.ShapeDtypeStruct((B, num_heads, S, hd), jnp.bfloat16)
                        for _ in range(2)),
        grid=(B, nq),
        in_specs=[pl.BlockSpec((1, TQ, H), lambda b, i: (b, i, 0)),
                  rep2(p["wkv"]), rep2(p["bkv"])],
        out_specs=tuple(pl.BlockSpec((1, num_heads, TQ, hd), lambda b, i: (b, 0, i, 0))
                        for _ in range(2)),
        compiler_params=pltpu.CompilerParams(
            dimension_semantics=("parallel", "parallel"),
            vmem_limit_bytes=vmem_limit),
    )(x, p["wkv"], p["bkv"])

    # ---- kernel 2: Q proj + flash attention + out-proj + LN + residual + MLP + LN + residual
    weights = [p["wq"], p["bq"], p["wo"], p["bo"], p["ln1g"], p["ln1b"],
               p["w1"], p["b1"], p["w2"], p["b2"], p["ln2g"], p["ln2b"]]

    in_specs = [
        pl.BlockSpec((1, TQ, H), lambda b, i, k: (b, i, 0)),                  # x (query rows)
        pl.BlockSpec((1, num_heads, TK, hd), lambda b, i, k: (b, 0, k, 0)),   # K tile
        pl.BlockSpec((1, num_heads, TK, hd), lambda b, i, k: (b, 0, k, 0)),   # V tile
    ] + [rep3(w) for w in weights]

    out = pl.pallas_call(
        make_block_core_kernel(TQ, TK, H, num_heads, eps),
        out_shape=jax.ShapeDtypeStruct((B, S, H), jnp.float32),
        grid=(B, nq, nkv),
        in_specs=in_specs,
        out_specs=pl.BlockSpec((1, TQ, H), lambda b, i, k: (b, i, 0)),
        scratch_shapes=[
            pltpu.VMEM((num_heads, TQ, hd), jnp.bfloat16),   # pre-scaled Q, head-major
            pltpu.VMEM((num_heads, TQ, 1), jnp.float32),     # running max  m
            pltpu.VMEM((num_heads, TQ, 1), jnp.float32),     # running sum  l
            pltpu.VMEM((num_heads, TQ, hd), jnp.float32),    # running numerator acc
            pltpu.VMEM((TQ, H), jnp.bfloat16),               # lane-concatenated context
        ],
        compiler_params=pltpu.CompilerParams(
            dimension_semantics=("parallel", "parallel", "arbitrary"),
            vmem_limit_bytes=vmem_limit),
    )(x, k_hm, v_hm, *weights)

    return out


# ------------------------------ params ----------------------------------------

def _linear_params(key, fan_in, fan_out):
    k1, k2 = jax.random.split(key)
    bound = 1.0 / math.sqrt(fan_in)
    w = jax.random.uniform(k1, (fan_in, fan_out), jnp.float32, -bound, bound)
    b = jax.random.uniform(k2, (1, fan_out), jnp.float32, -bound, bound)
    return w, b


def init_decoder_block_params(key, hidden, num_heads):
    keys = jax.random.split(key, 5)
    wq, bq = _linear_params(keys[0], hidden, hidden)
    wkv, bkv = _linear_params(keys[1], hidden, 2 * hidden)
    wo, bo = _linear_params(keys[2], hidden, hidden)
    w1, b1 = _linear_params(keys[3], hidden, 4 * hidden)
    w2, b2 = _linear_params(keys[4], 4 * hidden, hidden)
    return {
        # matmul weights stored bf16 (f32 accumulation in-kernel); biases / LN params f32
        "wq": wq.astype(jnp.bfloat16), "bq": bq,
        "wkv": wkv.astype(jnp.bfloat16), "bkv": bkv,
        "wo": wo.astype(jnp.bfloat16), "bo": bo,
        "ln1g": jnp.ones((1, hidden), jnp.float32), "ln1b": jnp.zeros((1, hidden), jnp.float32),
        "w1": w1.astype(jnp.bfloat16), "b1": b1,
        "w2": w2.astype(jnp.bfloat16), "b2": b2,
        "ln2g": jnp.ones((1, hidden), jnp.float32), "ln2b": jnp.zeros((1, hidden), jnp.float32),
    }


# ------------------------------------ main ------------------------------------

if __name__ == "__main__":
    cfg = dict(
        num_heads=4,
        hidden_size=32,
        dropout=0.1,                 # inference: identity
        layer_norm_epsilon=1e-5,
    )
    # NOTE: toy smoke-test shapes only (H=32, S=8 is >=75% lane padding); do not use for
    # performance evaluation.
    batch, seq_len = 2, 8

    key = jax.random.PRNGKey(0)
    k_params, k_x = jax.random.split(key)
    params = init_decoder_block_params(k_params, cfg["hidden_size"], cfg["num_heads"])
    x = jax.random.normal(k_x, (batch, seq_len, cfg["hidden_size"]), jnp.float32)

    out = decoder_block_forward(x, params, num_heads=cfg["num_heads"],
                                eps=cfg["layer_norm_epsilon"])
    out = jax.block_until_ready(out)

    assert out.shape == (batch, seq_len, cfg["hidden_size"])
    assert bool(jnp.all(jnp.isfinite(out)))
    print("KERNEL_OK")
</pallas_src>

<mosaic_0001>
module attributes {stable_mosaic.version = 11 : i64} {
  func.func @kernel(%arg0: i32, %arg1: i32, %arg2: memref<1x8x32xf32, #tpu.memory_space<vmem>>, %arg3: memref<32x64xbf16, #tpu.memory_space<vmem>>, %arg4: memref<1x64xf32, #tpu.memory_space<vmem>>, %arg5: memref<1x4x8x8xbf16, #tpu.memory_space<vmem>>, %arg6: memref<1x4x8x8xbf16, #tpu.memory_space<vmem>>) attributes {dimension_semantics = [#tpu.dimension_semantics<parallel>, #tpu.dimension_semantics<parallel>], iteration_bounds = array<i64: 2, 1>, scalar_prefetch = 0 : i64, scratch_operands = 0 : i64, tpu.core_type = #tpu.core_type<tc>, window_params = [{transform_indices = @transform_0, window_bounds = array<i64: 1, 8, 32>}, {pipeline_mode = #tpu.pipeline_mode<synchronous>, transform_indices = @transform_1, window_bounds = array<i64: 32, 64>}, {pipeline_mode = #tpu.pipeline_mode<synchronous>, transform_indices = @transform_2, window_bounds = array<i64: 1, 64>}, {transform_indices = @transform_3, window_bounds = array<i64: 1, 4, 8, 8>}, {transform_indices = @transform_4, window_bounds = array<i64: 1, 4, 8, 8>}]} {
    %c0 = arith.constant 0 : index
    %c0_0 = arith.constant 0 : index
    %c0_1 = arith.constant 0 : index
    %0 = vector.load %arg2[%c0, %c0_0, %c0_1] : memref<1x8x32xf32, #tpu.memory_space<vmem>>, vector<1x8x32xf32>
    %1 = vector.shape_cast %0 : vector<1x8x32xf32> to vector<8x32xf32>
    %2 = arith.truncf %1 : vector<8x32xf32> to vector<8x32xbf16>
    %c0_2 = arith.constant 0 : index
    %c0_3 = arith.constant 0 : index
    %3 = vector.load %arg3[%c0_2, %c0_3] : memref<32x64xbf16, #tpu.memory_space<vmem>>, vector<32x64xbf16>
    %cst = arith.constant dense<0.000000e+00> : vector<8x64xf32>
    %4 = tpu.matmul %2, %3, %cst {dimension_numbers = #tpu.dot_dimension_numbers<[1], [0], [0], [1], [0, 0, 1, 1], [], []>} : vector<8x32xbf16>, vector<32x64xbf16>, vector<8x64xf32> -> vector<8x64xf32>
    %c0_4 = arith.constant 0 : index
    %c0_5 = arith.constant 0 : index
    %5 = vector.load %arg4[%c0_4, %c0_5] : memref<1x64xf32, #tpu.memory_space<vmem>>, vector<1x64xf32>
    %6 = vector.shape_cast %5 : vector<1x64xf32> to vector<64xf32>
    %7 = vector.shape_cast %6 : vector<64xf32> to vector<1x64xf32>
    %8 = vector.broadcast %7 : vector<1x64xf32> to vector<8x64xf32>
    %9 = arith.addf %4, %8 : vector<8x64xf32>
    %10 = vector.extract_strided_slice %9 {offsets = [0, 0], sizes = [8, 8], strides = [1, 1]} : vector<8x64xf32> to vector<8x8xf32>
    %11 = arith.truncf %10 : vector<8x8xf32> to vector<8x8xbf16>
    %c0_6 = arith.constant 0 : index
    %c0_7 = arith.constant 0 : index
    %c0_8 = arith.constant 0 : index
    %c0_9 = arith.constant 0 : index
    %12 = vector.load %arg5[%c0_6, %c0_7, %c0_8, %c0_9] : memref<1x4x8x8xbf16, #tpu.memory_space<vmem>>, vector<1x1x8x8xbf16>
    %13 = vector.shape_cast %12 : vector<1x1x8x8xbf16> to vector<8x8xbf16>
    %14 = vector.shape_cast %11 : vector<8x8xbf16> to vector<1x1x8x8xbf16>
    tpu.vector_store %arg5[%c0_6, %c0_7, %c0_8, %c0_9], %14 {strides = array<i32>} : memref<1x4x8x8xbf16, #tpu.memory_space<vmem>>, vector<1x1x8x8xbf16>,
    %15 = vector.extract_strided_slice %9 {offsets = [0, 32], sizes = [8, 8], strides = [1, 1]} : vector<8x64xf32> to vector<8x8xf32>
    %16 = arith.truncf %15 : vector<8x8xf32> to vector<8x8xbf16>
    %c0_10 = arith.constant 0 : index
    %c0_11 = arith.constant 0 : index
    %c0_12 = arith.constant 0 : index
    %c0_13 = arith.constant 0 : index
    %17 = vector.load %arg6[%c0_10, %c0_11, %c0_12, %c0_13] : memref<1x4x8x8xbf16, #tpu.memory_space<vmem>>, vector<1x1x8x8xbf16>
    %18 = vector.shape_cast %17 : vector<1x1x8x8xbf16> to vector<8x8xbf16>
    %19 = vector.shape_cast %16 : vector<8x8xbf16> to vector<1x1x8x8xbf16>
    tpu.vector_store %arg6[%c0_10, %c0_11, %c0_12, %c0_13], %19 {strides = array<i32>} : memref<1x4x8x8xbf16, #tpu.memory_space<vmem>>, vector<1x1x8x8xbf16>,
    %20 = vector.extract_strided_slice %9 {offsets = [0, 8], sizes = [8, 8], strides = [1, 1]} : vector<8x64xf32> to vector<8x8xf32>
    %21 = arith.truncf %20 : vector<8x8xf32> to vector<8x8xbf16>
    %c0_14 = arith.constant 0 : index
    %c1 = arith.constant 1 : index
    %c0_15 = arith.constant 0 : index
    %c0_16 = arith.constant 0 : index
    %22 = vector.load %arg5[%c0_14, %c1, %c0_15, %c0_16] : memref<1x4x8x8xbf16, #tpu.memory_space<vmem>>, vector<1x1x8x8xbf16>
    %23 = vector.shape_cast %22 : vector<1x1x8x8xbf16> to vector<8x8xbf16>
    %24 = vector.shape_cast %21 : vector<8x8xbf16> to vector<1x1x8x8xbf16>
    tpu.vector_store %arg5[%c0_14, %c1, %c0_15, %c0_16], %24 {strides = array<i32>} : memref<1x4x8x8xbf16, #tpu.memory_space<vmem>>, vector<1x1x8x8xbf16>,
    %25 = vector.extract_strided_slice %9 {offsets = [0, 40], sizes = [8, 8], strides = [1, 1]} : vector<8x64xf32> to vector<8x8xf32>
    %26 = arith.truncf %25 : vector<8x8xf32> to vector<8x8xbf16>
    %c0_17 = arith.constant 0 : index
    %c1_18 = arith.constant 1 : index
    %c0_19 = arith.constant 0 : index
    %c0_20 = arith.constant 0 : index
    %27 = vector.load %arg6[%c0_17, %c1_18, %c0_19, %c0_20] : memref<1x4x8x8xbf16, #tpu.memory_space<vmem>>, vector<1x1x8x8xbf16>
    %28 = vector.shape_cast %27 : vector<1x1x8x8xbf16> to vector<8x8xbf16>
    %29 = vector.shape_cast %26 : vector<8x8xbf16> to vector<1x1x8x8xbf16>
    tpu.vector_store %arg6[%c0_17, %c1_18, %c0_19, %c0_20], %29 {strides = array<i32>} : memref<1x4x8x8xbf16, #tpu.memory_space<vmem>>, vector<1x1x8x8xbf16>,
    %30 = vector.extract_strided_slice %9 {offsets = [0, 16], sizes = [8, 8], strides = [1, 1]} : vector<8x64xf32> to vector<8x8xf32>
    %31 = arith.truncf %30 : vector<8x8xf32> to vector<8x8xbf16>
    %c0_21 = arith.constant 0 : index
    %c2 = arith.constant 2 : index
    %c0_22 = arith.constant 0 : index
    %c0_23 = arith.constant 0 : index
    %32 = vector.load %arg5[%c0_21, %c2, %c0_22, %c0_23] : memref<1x4x8x8xbf16, #tpu.memory_space<vmem>>, vector<1x1x8x8xbf16>
    %33 = vector.shape_cast %32 : vector<1x1x8x8xbf16> to vector<8x8xbf16>
    %34 = vector.shape_cast %31 : vector<8x8xbf16> to vector<1x1x8x8xbf16>
    tpu.vector_store %arg5[%c0_21, %c2, %c0_22, %c0_23], %34 {strides = array<i32>} : memref<1x4x8x8xbf16, #tpu.memory_space<vmem>>, vector<1x1x8x8xbf16>,
    %35 = vector.extract_strided_slice %9 {offsets = [0, 48], sizes = [8, 8], strides = [1, 1]} : vector<8x64xf32> to vector<8x8xf32>
    %36 = arith.truncf %35 : vector<8x8xf32> to vector<8x8xbf16>
    %c0_24 = arith.constant 0 : index
    %c2_25 = arith.constant 2 : index
    %c0_26 = arith.constant 0 : index
    %c0_27 = arith.constant 0 : index
    %37 = vector.load %arg6[%c0_24, %c2_25, %c0_26, %c0_27] : memref<1x4x8x8xbf16, #tpu.memory_space<vmem>>, vector<1x1x8x8xbf16>
    %38 = vector.shape_cast %37 : vector<1x1x8x8xbf16> to vector<8x8xbf16>
    %39 = vector.shape_cast %36 : vector<8x8xbf16> to vector<1x1x8x8xbf16>
    tpu.vector_store %arg6[%c0_24, %c2_25, %c0_26, %c0_27], %39 {strides = array<i32>} : memref<1x4x8x8xbf16, #tpu.memory_space<vmem>>, vector<1x1x8x8xbf16>,
    %40 = vector.extract_strided_slice %9 {offsets = [0, 24], sizes = [8, 8], strides = [1, 1]} : vector<8x64xf32> to vector<8x8xf32>
    %41 = arith.truncf %40 : vector<8x8xf32> to vector<8x8xbf16>
    %c0_28 = arith.constant 0 : index
    %c3 = arith.constant 3 : index
    %c0_29 = arith.constant 0 : index
    %c0_30 = arith.constant 0 : index
    %42 = vector.load %arg5[%c0_28, %c3, %c0_29, %c0_30] : memref<1x4x8x8xbf16, #tpu.memory_space<vmem>>, vector<1x1x8x8xbf16>
    %43 = vector.shape_cast %42 : vector<1x1x8x8xbf16> to vector<8x8xbf16>
    %44 = vector.shape_cast %41 : vector<8x8xbf16> to vector<1x1x8x8xbf16>
    tpu.vector_store %arg5[%c0_28, %c3, %c0_29, %c0_30], %44 {strides = array<i32>} : memref<1x4x8x8xbf16, #tpu.memory_space<vmem>>, vector<1x1x8x8xbf16>,
    %45 = vector.extract_strided_slice %9 {offsets = [0, 56], sizes = [8, 8], strides = [1, 1]} : vector<8x64xf32> to vector<8x8xf32>
    %46 = arith.truncf %45 : vector<8x8xf32> to vector<8x8xbf16>
    %c0_31 = arith.constant 0 : index
    %c3_32 = arith.constant 3 : index
    %c0_33 = arith.constant 0 : index
    %c0_34 = arith.constant 0 : index
    %47 = vector.load %arg6[%c0_31, %c3_32, %c0_33, %c0_34] : memref<1x4x8x8xbf16, #tpu.memory_space<vmem>>, vector<1x1x8x8xbf16>
    %48 = vector.shape_cast %47 : vector<1x1x8x8xbf16> to vector<8x8xbf16>
    %49 = vector.shape_cast %46 : vector<8x8xbf16> to vector<1x1x8x8xbf16>
    tpu.vector_store %arg6[%c0_31, %c3_32, %c0_33, %c0_34], %49 {strides = array<i32>} : memref<1x4x8x8xbf16, #tpu.memory_space<vmem>>, vector<1x1x8x8xbf16>,
    return
  }
  func.func @transform_0(%arg0: i32, %arg1: i32) -> (i32, i32, i32) {
    %c0_i32 = arith.constant 0 : i32
    %c0_i32_0 = arith.constant 0 : i32
    return %arg0, %arg1, %c0_i32 : i32, i32, i32
  }
  func.func @transform_1(%arg0: i32, %arg1: i32) -> (i32, i32) {
    %c0_i32 = arith.constant 0 : i32
    %c0_i32_0 = arith.constant 0 : i32
    %c0_i32_1 = arith.constant 0 : i32
    return %c0_i32, %c0_i32_0 : i32, i32
  }
  func.func @transform_2(%arg0: i32, %arg1: i32) -> (i32, i32) {
    %c0_i32 = arith.constant 0 : i32
    %c0_i32_0 = arith.constant 0 : i32
    %c0_i32_1 = arith.constant 0 : i32
    return %c0_i32, %c0_i32_0 : i32, i32
  }
  func.func @transform_3(%arg0: i32, %arg1: i32) -> (i32, i32, i32, i32) {
    %c0_i32 = arith.constant 0 : i32
    %c0_i32_0 = arith.constant 0 : i32
    %c0_i32_1 = arith.constant 0 : i32
    return %arg0, %c0_i32, %arg1, %c0_i32_0 : i32, i32, i32, i32
  }
  func.func @transform_4(%arg0: i32, %arg1: i32) -> (i32, i32, i32, i32) {
    %c0_i32 = arith.constant 0 : i32
    %c0_i32_0 = arith.constant 0 : i32
    %c0_i32_1 = arith.constant 0 : i32
    return %arg0, %c0_i32, %arg1, %c0_i32_0 : i32, i32, i32, i32
  }
}

</mosaic_0001>

<llo_original>
// kernel: tpu_custom_call.1
$region0: #{tpu_custom_call.1}
  #allocation0 [shape = 'u32[]', space=smem, size = 0x4, offset = 0x4, fixed_abs, tag = 'smem constant byte address 0x4 - core index']
  #allocation1 [shape = 'u32[144,128]{1,0:T(1,128)}', space=vmem, size = 0x12000, scoped, tag = 'internal scratch']
  %s0 = inlined_call_operand.hbm [shape: f32[2,8,32], index: 0, kind: input, shape index: {}]
  %s1 = inlined_call_operand.hbm [shape: bf16[32,64], index: 1, kind: input, shape index: {}]
  %s2 = inlined_call_operand.vmem [shape: f32[1,64], index: 2, kind: input, shape index: {}]
  %s3 = inlined_call_operand.hbm [shape: bf16[2,4,8,8], index: 3, kind: output, shape index: {0}]
  %s4 = inlined_call_operand.hbm [shape: bf16[2,4,8,8], index: 4, kind: output, shape index: {1}]
  %5 = xla_tuple %s3, %s4
  %s6 = sld [smem:[#allocation0]]
  $region61: #{tpu_custom_call.1} parent=0
    _
  %s8 = ssub.s32 1, %s6
  %s9 = scalar_select 0, %s8, %s6
  $region1: #{tpu_custom_call.1} parent=0
    #allocation2 [shape = 'u8[8192]{0}', space=vmem, size = 0x2000, scoped, tag = 'input window, operand 0']
    #allocation3 [shape = 's32[2]{0}', space=sflag, size = 0x8, scoped, tag = 'scoped memory for tpu_custom_call.1']
    #allocation4 [shape = 's32[2]{0}', space=sflag, size = 0x8, scoped, tag = 'scoped memory for tpu_custom_call.1']
    #allocation5 [shape = 'u8[8192]{0}', space=vmem, size = 0x2000, scoped, tag = 'input window, operand 1, single buffered']
    #allocation6 [shape = 's32[1]{0}', space=sflag, size = 0x4, scoped, tag = 'scoped memory for tpu_custom_call.1']
    #allocation7 [shape = 'u8[16384]{0}', space=vmem, size = 0x4000, scoped, tag = 'output window, operand 0']
    #allocation8 [shape = 'u8[16384]{0}', space=vmem, size = 0x4000, scoped, tag = 'output window, operand 1']
    #allocation9 [shape = 's32[2]{0}', space=sflag, size = 0x8, scoped, tag = 'scoped memory for tpu_custom_call.1']
    %10 = vsyncpa [#allocation3], 0
    %s11 = scalar_lea.sflag [#allocation3], 1
    %12 = vsyncpa %s11, 0
    %13 = vsyncpa [#allocation6], 0
    %14 = vsyncpa [#allocation4], 0
    %s15 = scalar_lea.sflag [#allocation4], 1
    %16 = vsyncpa %s15, 0
    %17 = vsyncpa [#allocation9], 0
    %s18 = scalar_lea.sflag [#allocation9], 1
    %19 = vsyncpa %s18, 0
    loop: start=0, step=1, limit=4
    $region2: #{tpu_custom_call.1} parent=1 // loop_pre_header
      _
    $region3: #{tpu_custom_call.1} parent=1 // loop_header
      %s21 = sphi 0, %s25
      %p22 = scmp.ge.s32.totalorder %s21, 4
      %s28 = sphi 0, %s40
      %s29 = sphi 0, %s36
      %s30 = sphi 0, %s28
      %s31 = sphi 0, %s29
      %s32 = sphi 0, %s30
      %s33 = sphi 0, %s31
      %s45 = sphi 0, %s47
      %s48 = sphi 0, %s45
      %s49 = sphi 0, %s48
      %s65 = sphi 0, %s49
      %s69 = sphi 0, %s69
      %s71 = sphi 0, %s69
      %s72 = sphi 0, %s71
      %s86 = sphi 0, %s72
      %s90 = sphi 0, %s90
      %s92 = sphi 0, %s90
      %s93 = sphi 0, %s92
      %s107 = sphi 0, %s93
      %s115 = sphi 0, %s117
      %s118 = sphi 0, %s115
      %s119 = sphi 0, %s118
      %s135 = sphi 0, %s119
      %s143 = sphi 0, %s145
      %s146 = sphi 0, %s143
      %s147 = sphi 0, %s146
      %s163 = sphi 0, %s147
    $region4: #{tpu_custom_call.1} parent=1 // loop_header_branch
      %24 = sbr.rel (%p22) target = $region8
    $region5: #{tpu_custom_call.1} parent=1 // loop_body
      %s26 = ssub.s32 %s21, 1
      %s27 = ssub.s32 %s21, 2
      %s34 = sadd.s32 1, %s29
      %p35 = scmp.ge.s32.totalorder %s34, 1
      %s36 = scalar_select %p35, 0, %s34
      %s37 = sadd.s32 1, %s28
      %s38 = scalar_select %p35, %s37, %s28
      %p39 = scmp.ge.s32.totalorder %s38, 2
      %s40 = scalar_select %p39, 0, %s38
      %s41 = ssub.s32 %s28, %s40
      %s42 = ssub.s32 %s29, %s36
      %s43 = sor.u32 %s41, %s42
      %p44 = scmp.eq.s32.totalorder %s43, 0
      %s46 = sadd.s32 %s45, 1
      %s47 = scalar_select %p44, %s45, %s46
      %p50 = pneg %p44
      %p51 = scmp.eq.s32.totalorder %s21, 1
      %p52 = por %p50, %p51
      %p53 = scmp.ne.s32.totalorder %s45, %s48
      %p54 = scmp.eq.s32.totalorder %s21, 0
      %p55 = por %p53, %p54
      %p56 = scmp.ne.s32.totalorder %s45, %s48
      %p57 = scmp.eq.s32.totalorder %s26, 1
      %p58 = por %p56, %p57
      %p59 = scmp.ne.s32.totalorder %s48, %s49
      %p60 = scmp.eq.s32.totalorder %s26, 0
      %p61 = por %p59, %p60
      %p62 = scmp.ne.s32.totalorder %s48, %s49
      %p63 = scmp.eq.s32.totalorder %s27, 1
      %p64 = por %p62, %p63
      %p66 = scmp.ne.s32.totalorder %s49, %s65
      %p67 = scmp.eq.s32.totalorder %s27, 0
      %p68 = por %p66, %p67
      %s70 = sadd.s32 %s69, 1
      %p73 = scmp.eq.s32.totalorder %s21, 1
      %p74 = scmp.ne.s32.totalorder %s69, %s71
      %p75 = scmp.eq.s32.totalorder %s21, 0
      %p76 = por %p74, %p75
      %p77 = scmp.ne.s32.totalorder %s69, %s71
      %p78 = scmp.eq.s32.totalorder %s26, 1
      %p79 = por %p77, %p78
      %p80 = scmp.ne.s32.totalorder %s71, %s72
      %p81 = scmp.eq.s32.totalorder %s26, 0
      %p82 = por %p80, %p81
      %p83 = scmp.ne.s32.totalorder %s71, %s72
      %p84 = scmp.eq.s32.totalorder %s27, 1
      %p85 = por %p83, %p84
      %p87 = scmp.ne.s32.totalorder %s72, %s86
      %p88 = scmp.eq.s32.totalorder %s27, 0
      %p89 = por %p87, %p88
      %s91 = sadd.s32 %s90, 1
      %p94 = scmp.eq.s32.totalorder %s21, 1
      %p95 = scmp.ne.s32.totalorder %s90, %s92
      %p96 = scmp.eq.s32.totalorder %s21, 0
      %p97 = por %p95, %p96
      %p98 = scmp.ne.s32.totalorder %s90, %s92
      %p99 = scmp.eq.s32.totalorder %s26, 1
      %p100 = por %p98, %p99
      %p101 = scmp.ne.s32.totalorder %s92, %s93
      %p102 = scmp.eq.s32.totalorder %s26, 0
      %p103 = por %p101, %p102
      %p104 = scmp.ne.s32.totalorder %s92, %s93
      %p105 = scmp.eq.s32.totalorder %s27, 1
      %p106 = por %p104, %p105
      %p108 = scmp.ne.s32.totalorder %s93, %s107
      %p109 = scmp.eq.s32.totalorder %s27, 0
      %p110 = por %p108, %p109
      %s111 = ssub.s32 %s28, %s40
      %s112 = ssub.s32 %s29, %s36
      %s113 = sor.u32 %s111, %s112
      %p114 = scmp.eq.s32.totalorder %s113, 0
      %s116 = sadd.s32 %s115, 1
      %s117 = scalar_select %p114, %s115, %s116
      %p120 = pneg %p114
      %p121 = scmp.eq.s32.totalorder %s21, 1
      %p122 = por %p120, %p121
      %p123 = scmp.ne.s32.totalorder %s115, %s118
      %p124 = scmp.eq.s32.totalorder %s21, 0
      %p125 = por %p123, %p124
      %p126 = scmp.ne.s32.totalorder %s115, %s118
      %p127 = scmp.eq.s32.totalorder %s26, 1
      %p128 = por %p126, %p127
      %p129 = scmp.ne.s32.totalorder %s118, %s119
      %p130 = scmp.eq.s32.totalorder %s26, 0
      %p131 = por %p129, %p130
      %p132 = scmp.ne.s32.totalorder %s118, %s119
      %p133 = scmp.eq.s32.totalorder %s27, 1
      %p134 = por %p132, %p133
      %p136 = scmp.ne.s32.totalorder %s119, %s135
      %p137 = scmp.eq.s32.totalorder %s27, 0
      %p138 = por %p136, %p137
      %s139 = ssub.s32 %s28, %s40
      %s140 = ssub.s32 %s29, %s36
      %s141 = sor.u32 %s139, %s140
      %p142 = scmp.eq.s32.totalorder %s141, 0
      %s144 = sadd.s32 %s143, 1
      %s145 = scalar_select %p142, %s143, %s144
      %p148 = pneg %p142
      %p149 = scmp.eq.s32.totalorder %s21, 1
      %p150 = por %p148, %p149
      %p151 = scmp.ne.s32.totalorder %s143, %s146
      %p152 = scmp.eq.s32.totalorder %s21, 0
      %p153 = por %p151, %p152
      %p154 = scmp.ne.s32.totalorder %s143, %s146
      %p155 = scmp.eq.s32.totalorder %s26, 1
      %p156 = por %p154, %p155
      %p157 = scmp.ne.s32.totalorder %s146, %s147
      %p158 = scmp.eq.s32.totalorder %s26, 0
      %p159 = por %p157, %p158
      %p160 = scmp.ne.s32.totalorder %s146, %s147
      %p161 = scmp.eq.s32.totalorder %s27, 1
      %p162 = por %p160, %p161
      %p164 = scmp.ne.s32.totalorder %s147, %s163
      %p165 = scmp.eq.s32.totalorder %s27, 0
      %p166 = por %p164, %p165
      %p167 = scmp.le.s32.totalorder 1, %s21
      %p168 = scmp.lt.s32.totalorder %s21, 3
      %p169 = pnand %p167, %p168
      %p170 = pneg %p169
      // Predicated region
      $region9: #{tpu_custom_call.1} parent=5 // pred_check
        _
      $region10: #{tpu_custom_call.1} parent=5 // pred_check_branch
        %172 = sbr.rel (%p169) target = $region12
      $region11: #{tpu_custom_call.1} parent=5 // pred_region
        %s173 = ssub.s32 %s21, 1
        // Predicated region
        $region13: #{tpu_custom_call.1} parent=11 // pred_check
          %p174 = pneg %p82
        $region14: #{tpu_custom_call.1} parent=11 // pred_check_branch
          %176 = sbr.rel (%p174) target = $region16
        $region15: #{tpu_custom_call.1} parent=11 // pred_region
          %s178 = ssub.s32 256, 256
          %179 = vsyncadd [#allocation6], %s178
          %s180 = sshll.u32 [#allocation5], 4
          %s181 = int_to_ptr.vmem [resolvable:$true] %s180
          %186 = dma.hbm_to_vmem [thread:$0]  %s1, 256, %s181, [#allocation6], 64, 64, 4
        $region16: #{tpu_custom_call.1} parent=11 // pred_fallthru
          _
        // Predicated region
        $region17: #{tpu_custom_call.1} parent=11 // pred_check
          %p187 = pneg %p103
        $region18: #{tpu_custom_call.1} parent=11 // pred_check_branch
          %189 = sbr.rel (%p187) target = $region20
        $region19: #{tpu_custom_call.1} parent=11 // pred_region
          _
        $region20: #{tpu_custom_call.1} parent=11 // pred_fallthru
          _
      $region12: #{tpu_custom_call.1} parent=5 // pred_fallthru
        _
      %p190 = scmp.lt.s32.totalorder %s21, 2
      // Predicated region
      $region21: #{tpu_custom_call.1} parent=5 // pred_check
        %p191 = pneg %p190
      $region22: #{tpu_custom_call.1} parent=5 // pred_check_branch
        %193 = sbr.rel (%p191) target = $region24
      $region23: #{tpu_custom_call.1} parent=5 // pred_region
        // Predicated region
        $region25: #{tpu_custom_call.1} parent=23 // pred_check
          %p194 = pneg %p55
        $region26: #{tpu_custom_call.1} parent=23 // pred_check_branch
          %196 = sbr.rel (%p194) target = $region28
        $region27: #{tpu_custom_call.1} parent=23 // pred_region
          %s197 = sand.u32 %s45, 1
          %s198 = scalar_lea.sflag [#allocation3], %s197
          %s199 = sand.u32 %s45, 1
          %s200 = smul.addr %s199, 8
          %s201 = scalar_lea.vmem [#allocation2], %s200
          %s203 = ssub.s32 128, 128
          %204 = vsyncadd %s198, %s203
          %s205 = sadd.s32 %s29, %s28
          %s206 = smul.addr %s205, 128
          %s207 = scalar_lea.hbm %s0, %s206
          %s209 = sshll.u32 %s201, 4
          %s210 = int_to_ptr.vmem [resolvable:$true] %s209
          %212 = dma.hbm_to_vmem [thread:$0]  %s207, 128, %s210, %s198
        $region28: #{tpu_custom_call.1} parent=23 // pred_fallthru
          _
      $region24: #{tpu_custom_call.1} parent=5 // pred_fallthru
        _
      %p213 = scmp.le.s32.totalorder 1, %s21
      %p214 = scmp.lt.s32.totalorder %s21, 3
      %p215 = pnand %p213, %p214
      %p216 = pneg %p215
      // Predicated region
      $region29: #{tpu_custom_call.1} parent=5 // pred_check
        _
      $region30: #{tpu_custom_call.1} parent=5 // pred_check_branch
        %218 = sbr.rel (%p215) target = $region32
      $region31: #{tpu_custom_call.1} parent=5 // pred_region
        %s219 = ssub.s32 %s21, 1
        %s220 = sand.u32 %s48, 1
        %s221 = scalar_lea.sflag [#allocation3], %s220
        %s222 = sand.u32 %s48, 1
        %s223 = smul.addr %s222, 8
        %s224 = scalar_lea.vmem [#allocation2], %s223
        // Predicated region
        $region33: #{tpu_custom_call.1} parent=31 // pred_check
          %p225 = pneg %p61
        $region34: #{tpu_custom_call.1} parent=31 // pred_check_branch
          %227 = sbr.rel (%p225) target = $region36
        $region35: #{tpu_custom_call.1} parent=31 // pred_region
          %228 = dma.done %s221, 128
        $region36: #{tpu_custom_call.1} parent=31 // pred_fallthru
          _
        // Predicated region
        $region37: #{tpu_custom_call.1} parent=31 // pred_check
          %p229 = pneg %p82
        $region38: #{tpu_custom_call.1} parent=31 // pred_check_branch
          %231 = sbr.rel (%p229) target = $region40
        $region39: #{tpu_custom_call.1} parent=31 // pred_region
          %232 = dma.done [#allocation6], 256
        $region40: #{tpu_custom_call.1} parent=31 // pred_fallthru
          _
        %s233 = sand.u32 %s48, 1
        %s234 = scalar_lea.sflag [#allocation3], %s233
        %s235 = sand.u32 %s48, 1
        %s236 = smul.addr %s235, 8
        %s237 = scalar_lea.vmem [#allocation2], %s236
        %p238 = pneg %p61
        %p239 = pneg %p58
        %p240 = pneg %p82
        %p241 = pneg %p79
        %p242 = pneg %p103
        %p243 = pneg %p100
        %p244 = pneg %p131
        %p245 = pneg %p128
        %s246 = sand.u32 %s118, 1
        %s247 = scalar_lea.sflag [#allocation4], %s246
        %s248 = sand.u32 %s118, 1
        %s249 = smul.addr %s248, 16
        %s250 = scalar_lea.vmem [#allocation7], %s249
        %p251 = pneg %p159
        %p252 = pneg %p156
        %s253 = sand.u32 %s146, 1
        %s254 = scalar_lea.sflag [#allocation9], %s253
        %s255 = sand.u32 %s146, 1
        %s256 = smul.addr %s255, 16
        %s257 = scalar_lea.vmem [#allocation8], %s256
        %v259 = vld [vmem:[%s224] sm:$0xff]
        %v260 = vpack.c.bf16 %v259, %v259
        %v261 = vld [vmem:[#allocation5] sm:$0xf]
        %v262 = vld [vmem:[#allocation5 + $0x4] sm:$0xf]
        %v263 = vld [vmem:[#allocation5 + $0x8] sm:$0xf]
        %v264 = vld [vmem:[#allocation5 + $0xc] sm:$0xf]
        %v265 = vld [vmem:[%s2] sm:$0x1]
        %v267 = vlaneseq
        %v268 = vshrl.u32 %v267, 7
        %v269 = vsub.s32 0, %v268
        %v270 = vrot.slane %v265, %v269
        %v276 = vunpack.c.l.b16 %v261
        %v277 = vunpack.c.l.b16 %v262
        %v278 = vunpack.c.l.b16 %v263
        %v279 = vunpack.c.l.b16 %v264
        %v280 = vpack.c.b16 %v277, %v276
        %v281 = vpack.c.b16 %v279, %v278
        %vm284 = vcmask 261120
        %v286 = vsel %vm284, %v260, 0
        %288 = vmatprep.subr.bf16.mxu0 0
        %289 = vmatpush1.bf16.msra.mxu0 %v280
        %290 = vmatprep.subr.bf16.mxu0 0
        %291 = vmatpush1.bf16.msra.mxu0 %v281
        %292 = vmatprep.subr.bf16.mxu0 0
        %293 = vmatpush1.bf16.msra.mxu0 0
        %294 = vmatprep.subr.bf16.mxu0 0
        %295 = vmatpush1.bf16.msra.mxu0 0
        %296 = vmatprep.subr.bf16.mxu0 0
        %297 = vmatpush1.bf16.msra.mxu0 0
        %298 = vmatprep.subr.bf16.mxu0 0
        %299 = vmatpush1.bf16.msra.mxu0 0
        %300 = vmatprep.subr.bf16.mxu0 0
        %301 = vmatpush1.bf16.msra.mxu0 0
        %302 = vmatprep.subr.bf16.mxu0 0
        %303 = vmatpush1.bf16.msra.mxu0 0
        %304 = vmatprep.subr.bf16.mxu0 0
        %305 = vmatpush1.bf16.msra.mxu0 0
        %306 = vmatprep.subr.bf16.mxu0 0
        %307 = vmatpush1.bf16.msra.mxu0 0
        %308 = vmatprep.subr.bf16.mxu0 0
        %309 = vmatpush1.bf16.msra.mxu0 0
        %310 = vmatprep.subr.bf16.mxu0 0
        %311 = vmatpush1.bf16.msra.mxu0 0
        %312 = vmatprep.subr.bf16.mxu0 0
        %313 = vmatpush1.bf16.msra.mxu0 0
        %314 = vmatprep.subr.bf16.mxu0 0
        %315 = vmatpush1.bf16.msra.mxu0 0
        %316 = vmatprep.subr.bf16.mxu0 0
        %317 = vmatpush1.bf16.msra.mxu0 0
        %318 = vmatprep.subr.bf16.mxu0 0
        %319 = vmatpush1.bf16.msra.mxu0 0
        %320 = vmatprep.mubr.bf16.mxu0 0
        %321 = vmatmul.mubr.bf16.gmra.mrb[0].mxu0 %v286
        %v322 = vpop.f32.mrb[0].mxu0
        %v323 = vadd.f32 %v270, %v322
        %v324 = vpop.f32.mrb[0].mxu0
        %v325 = vpop.f32.mrb[0].mxu0
        %v326 = vpop.f32.mrb[0].mxu0
        %327 = vdwg.mxu0
        %v328 = vpack.c.bf16 %v323, %v323
        %vm329 = vcmask 60416
        %330 = vst.msk [vmem:[%s250] sm:$0xf] %vm329, %v328
        %v332 = vunpack.c.l.b16 %v328
        %v333 = vpack.c.b16 %v332, %v332
        %334 = vrot.lane.b32.xlu0 %v333, 96
        %v335 = vpop.permute.xlu0 %334
        %337 = vst.msk [vmem:[%s257] sm:$0xf] %vm329, %v335
        %338 = vrot.lane.b32.xlu0 %v333, 120
        %v339 = vpop.permute.xlu0 %338
        %s341 = scalar_lea.vmem %s250, 4 [#allocation7]
        %342 = vst.msk [vmem:[%s341] sm:$0xf] %vm329, %v339
        %343 = vrot.lane.b32.xlu0 %v333, 88
        %v344 = vpop.permute.xlu0 %343
        %s346 = scalar_lea.vmem %s257, 4 [#allocation8]
        %347 = vst.msk [vmem:[%s346] sm:$0xf] %vm329, %v344
        %348 = vrot.lane.b32.xlu0 %v333, 112
        %v349 = vpop.permute.xlu0 %348
        %s351 = scalar_lea.vmem %s250, 8 [#allocation7]
        %352 = vst.msk [vmem:[%s351] sm:$0xf] %vm329, %v349
        %353 = vrot.lane.b32.xlu0 %v333, 80
        %v354 = vpop.permute.xlu0 %353
        %s356 = scalar_lea.vmem %s257, 8 [#allocation8]
        %357 = vst.msk [vmem:[%s356] sm:$0xf] %vm329, %v354
        %358 = vrot.lane.b32.xlu0 %v333, 104
        %v359 = vpop.permute.xlu0 %358
        %s361 = scalar_lea.vmem %s250, 12 [#allocation7]
        %362 = vst.msk [vmem:[%s361] sm:$0xf] %vm329, %v359
        %363 = vrot.lane.b32.xlu0 %v333, 72
        %v364 = vpop.permute.xlu0 %363
        %s366 = scalar_lea.vmem %s257, 12 [#allocation8]
        %367 = vst.msk [vmem:[%s366] sm:$0xf] %vm329, %v364
        %s368 = sand.u32 %s118, 1
        %s369 = scalar_lea.sflag [#allocation4], %s368
        %s370 = sand.u32 %s118, 1
        %s371 = smul.addr %s370, 16
        %s372 = scalar_lea.vmem [#allocation7], %s371
        %s373 = sand.u32 %s146, 1
        %s374 = scalar_lea.sflag [#allocation9], %s373
        %s375 = sand.u32 %s146, 1
        %s376 = smul.addr %s375, 16
        %s377 = scalar_lea.vmem [#allocation8], %s376
        // Predicated region
        $region41: #{tpu_custom_call.1} parent=31 // pred_check
          %p378 = pneg %p128
        $region42: #{tpu_custom_call.1} parent=31 // pred_check_branch
          %380 = sbr.rel (%p378) target = $region44
        $region43: #{tpu_custom_call.1} parent=31 // pred_region
          %s382 = ssub.s32 256, 256
          %383 = vsyncadd %s369, %s382
          %s384 = smul.addr %s30, 4
          %s385 = sadd.s32 %s31, %s384
          %s386 = smul.addr %s385, 64
          %s387 = scalar_lea.hbm %s3, %s386
          %s388 = sshll.u32 %s372, 4
          %s389 = int_to_ptr.vmem [resolvable:$true] %s388
          %394 = dma.vmem_to_hbm [thread:$0]  %s389, 256, %s387, %s369, 64, 64, 4
        $region44: #{tpu_custom_call.1} parent=31 // pred_fallthru
          _
        // Predicated region
        $region45: #{tpu_custom_call.1} parent=31 // pred_check
          %p395 = pneg %p156
        $region46: #{tpu_custom_call.1} parent=31 // pred_check_branch
          %397 = sbr.rel (%p395) target = $region48
        $region47: #{tpu_custom_call.1} parent=31 // pred_region
          %s399 = ssub.s32 256, 256
          %400 = vsyncadd %s374, %s399
          %s401 = smul.addr %s30, 4
          %s402 = sadd.s32 %s31, %s401
          %s403 = smul.addr %s402, 64
          %s404 = scalar_lea.hbm %s4, %s403
          %s405 = sshll.u32 %s377, 4
          %s406 = int_to_ptr.vmem [resolvable:$true] %s405
          %411 = dma.vmem_to_hbm [thread:$0]  %s406, 256, %s404, %s374, 64, 64, 4
        $region48: #{tpu_custom_call.1} parent=31 // pred_fallthru
          _
      $region32: #{tpu_custom_call.1} parent=5 // pred_fallthru
        _
      %p412 = scmp.le.s32.totalorder 2, %s21
      // Predicated region
      $region49: #{tpu_custom_call.1} parent=5 // pred_check
        %p413 = pneg %p412
      $region50: #{tpu_custom_call.1} parent=5 // pred_check_branch
        %415 = sbr.rel (%p413) target = $region52
      $region51: #{tpu_custom_call.1} parent=5 // pred_region
        %s416 = ssub.s32 %s21, 2
        // Predicated region
        $region53: #{tpu_custom_call.1} parent=51 // pred_check
          %p417 = pneg %p134
        $region54: #{tpu_custom_call.1} parent=51 // pred_check_branch
          %419 = sbr.rel (%p417) target = $region56
        $region55: #{tpu_custom_call.1} parent=51 // pred_region
          %s420 = sand.u32 %s119, 1
          %s421 = scalar_lea.sflag [#allocation4], %s420
          %s422 = sand.u32 %s119, 1
          %s423 = smul.addr %s422, 16
          %s424 = scalar_lea.vmem [#allocation7], %s423
          %425 = dma.done %s421, 256
        $region56: #{tpu_custom_call.1} parent=51 // pred_fallthru
          _
        // Predicated region
        $region57: #{tpu_custom_call.1} parent=51 // pred_check
          %p426 = pneg %p162
        $region58: #{tpu_custom_call.1} parent=51 // pred_check_branch
          %428 = sbr.rel (%p426) target = $region60
        $region59: #{tpu_custom_call.1} parent=51 // pred_region
          %s429 = sand.u32 %s147, 1
          %s430 = scalar_lea.sflag [#allocation9], %s429
          %s431 = sand.u32 %s147, 1
          %s432 = smul.addr %s431, 16
          %s433 = scalar_lea.vmem [#allocation8], %s432
          %434 = dma.done %s430, 256
        $region60: #{tpu_custom_call.1} parent=51 // pred_fallthru
          _
      $region52: #{tpu_custom_call.1} parent=5 // pred_fallthru
        _
    $region6: #{tpu_custom_call.1} parent=1 // loop_footer
      %s25 = sadd.s32 1, %s21
    $region7: #{tpu_custom_call.1} parent=1 // loop_footer_branch
      %20 = sbr.rel target = $region3
    $region8: #{tpu_custom_call.1} parent=1 // loop_exit
      _
    %435 = vsyncpa [#allocation3], 1
    %s436 = scalar_lea.sflag [#allocation3], 1
    %437 = vsyncpa %s436, 1
    %438 = vsyncpa [#allocation6], 1
    %439 = vsyncpa [#allocation4], 1
    %s440 = scalar_lea.sflag [#allocation4], 1
    %441 = vsyncpa %s440, 1
    %442 = vsyncpa [#allocation9], 1
    %s443 = scalar_lea.sflag [#allocation9], 1
    %444 = vsyncpa %s443, 1

</llo_original>
